<compile_context>
chip_gen: v5e
topology: v5e:2x2
jax: 0.10.0
libtpu: 0.0.40
codegen_flags: <defaults>
</compile_context>

<pallas_src>
import functools

import jax
import jax.numpy as jnp
from jax.experimental import pallas as pl
from jax.experimental.pallas import tpu as pltpu


_LANE = 128  # TPU vreg lane width


def _linear_clamp_kernel(x_ref, w_ref, b_ref, o_ref, *, min_value, max_value):
    # Transposed, lane-dense layout:
    #   x_ref: (IN,  TB)  batch on lanes
    #   w_ref: (OUT, IN)  tiny, grid-invariant (VMEM-resident)
    #   b_ref: (OUT, 1)
    #   o_ref: (OUT, TB)  lane-dense output
    x = x_ref[...]
    w = w_ref[...]
    in_features = w.shape[1]

    # VPU broadcast-FMAs (outer-product accumulation), no MXU:
    #   y[o, b] = bias[o] + sum_i w[o, i] * x[i, b]
    y = jnp.broadcast_to(b_ref[...], o_ref.shape).astype(jnp.float32)
    for i in range(in_features):  # IN = 3, static unroll
        y = y + w[:, i : i + 1] * x[i : i + 1, :]

    # torch.clamp_min / clamp_max with None -> identity (decided statically)
    if min_value is not None:
        y = jnp.maximum(y, jnp.float32(min_value))
    if max_value is not None:
        y = jnp.minimum(y, jnp.float32(max_value))

    o_ref[...] = y.astype(o_ref.dtype)


def linear_clamp(x, weight, bias, *, min_value=None, max_value=None, tile_b=512):
    """x: (B, IN) f32, weight: (OUT, IN) f32, bias: (OUT,) f32 -> (B, OUT)."""
    B, IN = x.shape
    OUT = weight.shape[0]

    # Pad batch to a multiple of the lane width and pick a lane-aligned tile.
    Bp = pl.cdiv(B, _LANE) * _LANE
    tb = min(tile_b, Bp)          # tile_b and Bp are both multiples of 128
    Bp = pl.cdiv(Bp, tb) * tb
    grid_b = Bp // tb

    # One-time XLA-side transpose/pad; batch lives on lanes inside the kernel.
    xT = jnp.zeros((IN, Bp), dtype=x.dtype).at[:, :B].set(x.T)
    bias2d = bias.reshape(OUT, 1)

    kernel = functools.partial(
        _linear_clamp_kernel, min_value=min_value, max_value=max_value
    )

    yT = pl.pallas_call(
        kernel,
        out_shape=jax.ShapeDtypeStruct((OUT, Bp), x.dtype),
        grid=(grid_b,),
        in_specs=[
            pl.BlockSpec((IN, tb), lambda i: (0, i)),     # streamed batch tiles
            pl.BlockSpec((OUT, IN), lambda i: (0, 0)),    # grid-invariant weight
            pl.BlockSpec((OUT, 1), lambda i: (0, 0)),     # grid-invariant bias
        ],
        out_specs=pl.BlockSpec((OUT, tb), lambda i: (0, i)),
        compiler_params=pltpu.CompilerParams(
            # Batch tiles are independent -> shard across the 2 TCs on v7x.
            dimension_semantics=("parallel",),
        ),
    )(xT, weight, bias2d)

    # Trim padding and return to the PyTorch (B, OUT) layout.
    return yT[:, :B].T


if __name__ == "__main__":
    key = jax.random.PRNGKey(0)
    k_x, k_w, k_b = jax.random.split(key, 3)

    B, IN, OUT = 2, 3, 8  # module implies Linear(3, 8); small batch=2

    x = jax.random.normal(k_x, (B, IN), dtype=jnp.float32)
    # Deterministic init mimicking torch.nn.Linear default (uniform +/- 1/sqrt(IN))
    bound = 1.0 / (IN ** 0.5)
    weight = jax.random.uniform(k_w, (OUT, IN), dtype=jnp.float32,
                                minval=-bound, maxval=bound)
    bias = jax.random.uniform(k_b, (OUT,), dtype=jnp.float32,
                              minval=-bound, maxval=bound)

    # Module defaults: min_value=None, max_value=None (identity clamps).
    out = linear_clamp(x, weight, bias, min_value=None, max_value=None)
    out = jax.block_until_ready(out)
    ref = x @ weight.T + bias
    assert jnp.allclose(out, ref, atol=1e-5, rtol=1e-5), "mismatch vs reference"

    # Also exercise the static clamp path (clamp_min then clamp_max semantics).
    out_c = linear_clamp(x, weight, bias, min_value=-0.1, max_value=0.2)
    out_c = jax.block_until_ready(out_c)
    ref_c = jnp.minimum(jnp.maximum(ref, -0.1), 0.2)
    assert jnp.allclose(out_c, ref_c, atol=1e-5, rtol=1e-5), "mismatch vs clamped reference"

    print("KERNEL_OK")
</pallas_src>

<mosaic_0001>
module attributes {stable_mosaic.version = 11 : i64} {
  func.func @_linear_clamp_kernel(%arg0: i32, %arg1: memref<3x128xf32, #tpu.memory_space<vmem>>, %arg2: memref<8x3xf32, #tpu.memory_space<vmem>>, %arg3: memref<8x1xf32, #tpu.memory_space<vmem>>, %arg4: memref<8x128xf32, #tpu.memory_space<vmem>>) attributes {dimension_semantics = [#tpu.dimension_semantics<parallel>], iteration_bounds = array<i64: 1>, scalar_prefetch = 0 : i64, scratch_operands = 0 : i64, tpu.core_type = #tpu.core_type<tc>, window_params = [{transform_indices = @transform_0, window_bounds = array<i64: 3, 128>}, {pipeline_mode = #tpu.pipeline_mode<synchronous>, transform_indices = @transform_1, window_bounds = array<i64: 8, 3>}, {pipeline_mode = #tpu.pipeline_mode<synchronous>, transform_indices = @transform_2, window_bounds = array<i64: 8, 1>}, {transform_indices = @transform_3, window_bounds = array<i64: 8, 128>}]} {
    %c0 = arith.constant 0 : index
    %c0_0 = arith.constant 0 : index
    %0 = vector.load %arg1[%c0, %c0_0] : memref<3x128xf32, #tpu.memory_space<vmem>>, vector<3x128xf32>
    %c0_1 = arith.constant 0 : index
    %c0_2 = arith.constant 0 : index
    %1 = vector.load %arg2[%c0_1, %c0_2] : memref<8x3xf32, #tpu.memory_space<vmem>>, vector<8x3xf32>
    %c0_3 = arith.constant 0 : index
    %c0_4 = arith.constant 0 : index
    %2 = vector.load %arg3[%c0_3, %c0_4] : memref<8x1xf32, #tpu.memory_space<vmem>>, vector<8x1xf32>
    %3 = vector.shape_cast %2 : vector<8x1xf32> to vector<8x1xf32>
    %4 = vector.broadcast %3 : vector<8x1xf32> to vector<8x128xf32>
    %5 = vector.extract_strided_slice %1 {offsets = [0, 0], sizes = [8, 1], strides = [1, 1]} : vector<8x3xf32> to vector<8x1xf32>
    %6 = vector.extract_strided_slice %0 {offsets = [0, 0], sizes = [1, 128], strides = [1, 1]} : vector<3x128xf32> to vector<1x128xf32>
    %7 = vector.broadcast %5 : vector<8x1xf32> to vector<8x128xf32>
    %8 = vector.broadcast %6 : vector<1x128xf32> to vector<8x128xf32>
    %9 = arith.mulf %7, %8 : vector<8x128xf32>
    %10 = arith.addf %4, %9 : vector<8x128xf32>
    %11 = vector.extract_strided_slice %1 {offsets = [0, 1], sizes = [8, 1], strides = [1, 1]} : vector<8x3xf32> to vector<8x1xf32>
    %12 = vector.extract_strided_slice %0 {offsets = [1, 0], sizes = [1, 128], strides = [1, 1]} : vector<3x128xf32> to vector<1x128xf32>
    %13 = vector.broadcast %11 : vector<8x1xf32> to vector<8x128xf32>
    %14 = vector.broadcast %12 : vector<1x128xf32> to vector<8x128xf32>
    %15 = arith.mulf %13, %14 : vector<8x128xf32>
    %16 = arith.addf %10, %15 : vector<8x128xf32>
    %17 = vector.extract_strided_slice %1 {offsets = [0, 2], sizes = [8, 1], strides = [1, 1]} : vector<8x3xf32> to vector<8x1xf32>
    %18 = vector.extract_strided_slice %0 {offsets = [2, 0], sizes = [1, 128], strides = [1, 1]} : vector<3x128xf32> to vector<1x128xf32>
    %19 = vector.broadcast %17 : vector<8x1xf32> to vector<8x128xf32>
    %20 = vector.broadcast %18 : vector<1x128xf32> to vector<8x128xf32>
    %21 = arith.mulf %19, %20 : vector<8x128xf32>
    %22 = arith.addf %16, %21 : vector<8x128xf32>
    %c0_5 = arith.constant 0 : index
    %c0_6 = arith.constant 0 : index
    %23 = vector.load %arg4[%c0_5, %c0_6] : memref<8x128xf32, #tpu.memory_space<vmem>>, vector<8x128xf32>
    tpu.vector_store %arg4[%c0_5, %c0_6], %22 {strides = array<i32>} : memref<8x128xf32, #tpu.memory_space<vmem>>, vector<8x128xf32>,
    return
  }
  func.func @transform_0(%arg0: i32) -> (i32, i32) {
    %c0_i32 = arith.constant 0 : i32
    %c0_i32_0 = arith.constant 0 : i32
    return %c0_i32, %arg0 : i32, i32
  }
  func.func @transform_1(%arg0: i32) -> (i32, i32) {
    %c0_i32 = arith.constant 0 : i32
    %c0_i32_0 = arith.constant 0 : i32
    %c0_i32_1 = arith.constant 0 : i32
    return %c0_i32, %c0_i32_0 : i32, i32
  }
  func.func @transform_2(%arg0: i32) -> (i32, i32) {
    %c0_i32 = arith.constant 0 : i32
    %c0_i32_0 = arith.constant 0 : i32
    %c0_i32_1 = arith.constant 0 : i32
    return %c0_i32, %c0_i32_0 : i32, i32
  }
  func.func @transform_3(%arg0: i32) -> (i32, i32) {
    %c0_i32 = arith.constant 0 : i32
    %c0_i32_0 = arith.constant 0 : i32
    return %c0_i32, %arg0 : i32, i32
  }
}

</mosaic_0001>

<llo_original>
// kernel: tpu_custom_call.1
$region0: #{tpu_custom_call.1}
  #allocation0 [shape = 'u32[]', space=smem, size = 0x4, offset = 0x4, fixed_abs, tag = 'smem constant byte address 0x4 - core index']
  #allocation1 [shape = 'u32[72,128]{1,0:T(1,128)}', space=vmem, size = 0x9000, scoped, tag = 'internal scratch']
  %s0 = inlined_call_operand.vmem [shape: f32[3,128], index: 0, kind: input, shape index: {}]
  %s1 = inlined_call_operand.vmem [shape: f32[8,3], index: 1, kind: input, shape index: {}]
  %s2 = inlined_call_operand.vmem [shape: f32[8,1], index: 2, kind: input, shape index: {}]
  %s3 = inlined_call_operand.hbm [shape: f32[8,128], index: 3, kind: output, shape index: {}]
  %s4 = sld [smem:[#allocation0]]
  $region22: #{tpu_custom_call.1} parent=0
    _
  %s6 = ssub.s32 1, %s4
  %s7 = scalar_select 0, %s6, %s4
  $region1: #{tpu_custom_call.1} parent=0
    #allocation2 [shape = 'u8[4096]{0}', space=vmem, size = 0x1000, scoped, tag = 'output window, operand 0, single buffered']
    #allocation3 [shape = 's32[1]{0}', space=sflag, size = 0x4, scoped, tag = 'scoped memory for tpu_custom_call.1']
    %8 = vsyncpa [#allocation3], 0
    // Predicated region
    $region2: #{tpu_custom_call.1} parent=1 // pred_check
      _
    $region3: #{tpu_custom_call.1} parent=1 // pred_check_branch
      %10 = sbr.rel (0) target = $region5
    $region4: #{tpu_custom_call.1} parent=1 // pred_region
      _
    $region5: #{tpu_custom_call.1} parent=1 // pred_fallthru
      _
    // Predicated region
    $region6: #{tpu_custom_call.1} parent=1 // pred_check
      _
    $region7: #{tpu_custom_call.1} parent=1 // pred_check_branch
      %12 = sbr.rel (0) target = $region9
    $region8: #{tpu_custom_call.1} parent=1 // pred_region
      _
    $region9: #{tpu_custom_call.1} parent=1 // pred_fallthru
      _
    // Predicated region
    $region10: #{tpu_custom_call.1} parent=1 // pred_check
      _
    $region11: #{tpu_custom_call.1} parent=1 // pred_check_branch
      %14 = sbr.rel (0) target = $region13
    $region12: #{tpu_custom_call.1} parent=1 // pred_region
      _
    $region13: #{tpu_custom_call.1} parent=1 // pred_fallthru
      _
    %v15 = vld [vmem:[%s0] sm:$0x7]
    %v16 = vld [vmem:[%s1] sm:$0xff]
    %v17 = vld [vmem:[%s2] sm:$0xff]
    %19 = vset.pattern.permute.xlu0 0
    %20 = vperm.xlu0 %19, %v17
    %v21 = vpop.permute.xlu0 %20
    %24 = vset.pattern.permute.xlu0 0
    %25 = vperm.xlu0 %24, %v16
    %v26 = vpop.permute.xlu0 %25
    %v28 = vperm.slane %v15, 0
    %v29 = vmul.f32 %v26, %v28
    %v30 = vadd.f32 %v21, %v29
    %31 = vset.pattern.permute.xlu0 1
    %32 = vperm.xlu0 %31, %v16
    %v33 = vpop.permute.xlu0 %32
    %v35 = vperm.slane %v15, 1
    %v36 = vmul.f32 %v33, %v35
    %v37 = vadd.f32 %v30, %v36
    %38 = vset.pattern.permute.xlu0 2
    %39 = vperm.xlu0 %38, %v16
    %v40 = vpop.permute.xlu0 %39
    %v42 = vperm.slane %v15, 2
    %v43 = vmul.f32 %v40, %v42
    %v44 = vadd.f32 %v37, %v43
    %45 = vst [vmem:[#allocation2] sm:$0xff] %v44
    // Predicated region
    $region14: #{tpu_custom_call.1} parent=1 // pred_check
      _
    $region15: #{tpu_custom_call.1} parent=1 // pred_check_branch
      %47 = sbr.rel (0) target = $region17
    $region16: #{tpu_custom_call.1} parent=1 // pred_region
      %49 = vsyncadd [#allocation3], 0
      %s51 = sshll.u32 [#allocation2], 4
      %s52 = int_to_ptr.vmem [resolvable:$true] %s51
      %s53 = sshll.u32 %s3, 4
      %s54 = int_to_ptr.hbm [resolvable:$true] %s53
      %56 = dma.vmem_to_hbm [thread:$0]  %s52, 128, %s54, [#allocation3]
    $region17: #{tpu_custom_call.1} parent=1 // pred_fallthru
      _
    // Predicated region
    $region18: #{tpu_custom_call.1} parent=1 // pred_check
      _
    $region19: #{tpu_custom_call.1} parent=1 // pred_check_branch
      %58 = sbr.rel (0) target = $region21
    $region20: #{tpu_custom_call.1} parent=1 // pred_region
      %60 = dma.done [#allocation3], 128
    $region21: #{tpu_custom_call.1} parent=1 // pred_fallthru
      _
    %61 = vsyncpa [#allocation3], 1

</llo_original>
